<compile_context>
chip_gen: v7x
topology: tpu7x:2x2x1
jax: 0.10.0
libtpu: 0.0.40
codegen_flags: <defaults>
</compile_context>

<pallas_src>
import math
import functools

import jax
import jax.numpy as jnp
from jax.experimental import pallas as pl
from jax.experimental.pallas import tpu as pltpu

_SQRT2 = math.sqrt(2.0)


# -----------------------------------------------------------------------------
# Kernel: one (tile, step) grid point of the backward Euler-Maruyama trajectory
# -----------------------------------------------------------------------------
def _step_kernel(a_ref, b_ref, x0_ref, w1_ref, w2_ref, *rest, stochastic):
    """Layout: state slabs are (k*C, TILE_N) with pixels on the lane axis.

    `out_ref` is the VMEM-resident SDE state: the same output block is revisited for every
    step of a tile (initialized at step 0, written back to HBM only when the tile changes).
    """
    if stochastic:
        c_ref, noise_ref, out_ref = rest
    else:
        (out_ref,) = rest

    step = pl.program_id(1)

    @pl.when(step == 0)
    def _():
        out_ref[...] = x0_ref[...]

    x = out_ref[...]                                      # (kC, TILE_N) float32

    # Synthetic per-pixel channel-MLP denoiser (raw MLP output; the 1/(1+sigma) factor is
    # folded into the `b` coefficient).  bf16 MXU operands, f32 accumulation.
    h = jnp.maximum(
        jnp.dot(w1_ref[...], x.astype(jnp.bfloat16),
                preferred_element_type=jnp.float32), 0.0)
    den = jnp.dot(w2_ref[...], h.astype(jnp.bfloat16),
                  preferred_element_type=jnp.float32)

    # Euler-Maruyama update with all scalar algebra pre-folded into (a, b, c).
    new_x = a_ref[step] * x + b_ref[step] * den
    if stochastic:
        new_x = new_x + c_ref[step] * noise_ref[0]
    out_ref[...] = new_x


def _fused_backward_euler(a_co, b_co, x0_p, w1_bd, w2_bd, c_co=None, noise=None,
                          *, tile_n, stochastic):
    """a_co,b_co,c_co: (n_steps,) f32; x0_p: (kC, Np) f32; w*_bd: block-diag bf16 weights;
    noise: (n_steps, kC, Np) f32 when stochastic."""
    kc, np_ = x0_p.shape
    kh = w1_bd.shape[0]
    n_steps = a_co.shape[0]
    n_tiles = np_ // tile_n

    in_specs = [
        pl.BlockSpec(memory_space=pltpu.SMEM),                  # a coefficients (1-D)
        pl.BlockSpec(memory_space=pltpu.SMEM),                  # b coefficients (1-D)
        pl.BlockSpec((kc, tile_n), lambda i, s: (0, i)),        # prior sample x0
        pl.BlockSpec((kh, kc), lambda i, s: (0, 0)),            # blockdiag(W1^T)  (resident)
        pl.BlockSpec((kc, kh), lambda i, s: (0, 0)),            # blockdiag(W2^T)  (resident)
    ]
    args = [a_co, b_co, x0_p, w1_bd, w2_bd]
    if stochastic:
        in_specs += [
            pl.BlockSpec(memory_space=pltpu.SMEM),              # c coefficients (1-D)
            pl.BlockSpec((1, kc, tile_n), lambda i, s: (s, 0, i)),  # per-step noise block
        ]
        args += [c_co, noise]

    # Explicit VMEM budget: double-buffered x0 + noise, resident out block, f32 MLP
    # intermediate, weights, plus margin.  Keeps v5e's 16 MiB default from silently failing
    # while staying below v7x's 64 MiB physical VMEM.
    block_bytes = kc * tile_n * 4
    vmem_need = 6 * block_bytes + 2 * kh * tile_n * 4 + 2 * (kh * kc * 2) + (4 << 20)
    vmem_limit = int(min(max(vmem_need, 32 << 20), 56 << 20))

    kernel = functools.partial(_step_kernel, stochastic=stochastic)

    return pl.pallas_call(
        kernel,
        out_shape=jax.ShapeDtypeStruct((kc, np_), jnp.float32),
        grid=(n_tiles, n_steps),
        in_specs=in_specs,
        out_specs=pl.BlockSpec((kc, tile_n), lambda i, s: (0, i)),   # VMEM-resident state
        compiler_params=pltpu.CompilerParams(
            # tile axis shards across TensorCores (v7x megacore); step axis carries state.
            dimension_semantics=("parallel", "arbitrary"),
            vmem_limit_bytes=vmem_limit,
        ),
    )(*args)


# -----------------------------------------------------------------------------
# End-to-end (jitted) backward-SDE sampling
# -----------------------------------------------------------------------------
@functools.partial(jax.jit, static_argnames=("pack_k", "tile_n", "stochastic"))
def _sample_backward_sde(x_nchw, timesteps, noise_key, w1t, w2t,
                         *, pack_k, tile_n, stochastic=True):
    bsz, c, h, w = x_nchw.shape
    n = bsz * h * w
    np_ = n // pack_k
    kc = pack_k * c

    # NCHW -> (C, N) -> sublane-packed (k*C, N/k): channels*groups on sublanes, pixels on lanes.
    x_cn = jnp.transpose(x_nchw, (1, 0, 2, 3)).reshape(c, n).astype(jnp.float32)
    x_p = x_cn.reshape(c, pack_k, np_).transpose(1, 0, 2).reshape(kc, np_)

    # Block-diagonal weights: each pixel group gets its own copy of W1^T / W2^T on the MXU.
    eye_k = jnp.eye(pack_k, dtype=jnp.float32)
    w1_bd = jnp.kron(eye_k, w1t.astype(jnp.float32)).astype(jnp.bfloat16)   # (k*hidden, k*C)
    w2_bd = jnp.kron(eye_k, w2t.astype(jnp.float32)).astype(jnp.bfloat16)   # (k*C, k*hidden)

    # Per-step scalar algebra folded into three coefficients (1-D, SMEM-friendly).
    ts = jnp.asarray(timesteps, jnp.float32)
    t_cur = ts[:-1]
    dt = ts[1:] - t_cur
    sigma2 = -jnp.expm1(-2.0 * t_cur)                     # stable near t -> 0
    sigma = jnp.sqrt(sigma2)
    a_co = (1.0 + dt * (1.0 - 2.0 / sigma2)).astype(jnp.float32)            # x coefficient
    b_co = (2.0 * dt * jnp.exp(-t_cur) / (sigma2 * (1.0 + sigma))).astype(jnp.float32)
    n_steps = a_co.shape[0]

    if stochastic:
        c_co = (_SQRT2 * jnp.sqrt(jnp.abs(dt))).astype(jnp.float32)         # noise coefficient
        noise = jax.random.normal(noise_key, (n_steps, kc, np_), jnp.float32)
        out_p = _fused_backward_euler(a_co, b_co, x_p, w1_bd, w2_bd, c_co, noise,
                                      tile_n=tile_n, stochastic=True)
    else:
        out_p = _fused_backward_euler(a_co, b_co, x_p, w1_bd, w2_bd,
                                      tile_n=tile_n, stochastic=False)

    out_cn = out_p.reshape(pack_k, c, np_).transpose(1, 0, 2).reshape(c, n)
    return jnp.transpose(out_cn.reshape(c, bsz, h, w), (1, 0, 2, 3))


def _pick_pack_k(c, n, requested=None):
    """Number of pixel groups packed into the sublane axis (fills 8 sublanes, deepens MXU K)."""
    if requested is not None:
        assert n % requested == 0 and (n // requested) % 128 == 0, \
            "pack_k must divide B*H*W with (B*H*W)/pack_k a multiple of 128"
        return requested
    for k in (8, 4, 2, 1):
        if (k == 1 or k * c <= 32) and n % k == 0 and (n // k) % 128 == 0:
            return k
    raise ValueError("B*H*W must be a multiple of 128")


def _pick_tile_n(np_, requested=None):
    """Lane-tile size over packed pixels; prefers >=2 tiles so v7x megacore can shard."""
    if requested is not None:
        assert requested % 128 == 0 and np_ % requested == 0, \
            "tile_n must be a multiple of 128 that divides (B*H*W)/pack_k"
        return requested
    cands = (8192, 4096, 2048, 1024, 512, 256, 128)
    for cand in cands:                       # prefer at least 2 tiles (v7x megacore)
        if np_ % cand == 0 and np_ // cand >= 2:
            return cand
    for cand in cands:
        if np_ % cand == 0:
            return cand
    raise ValueError("(B*H*W)/pack_k must be a multiple of 128")


# -----------------------------------------------------------------------------
# DiffusionSDE wrapper
# -----------------------------------------------------------------------------
class DiffusionSDEPallas:
    """Ornstein-Uhlenbeck DiffusionSDE (backward Euler-Maruyama sampling) with a synthetic
    channel-MLP denoiser, fused into a single Pallas TPU kernel."""

    def __init__(self, channels, hidden=32, key=None):
        self.g = _SQRT2
        key = key if key is not None else jax.random.PRNGKey(0)
        k1, k2 = jax.random.split(key)
        self.w1 = (jax.random.normal(k1, (channels, hidden), jnp.float32)
                   / math.sqrt(channels))
        self.w2 = (jax.random.normal(k2, (hidden, channels), jnp.float32)
                   / math.sqrt(hidden))
        # Transposed copies for the lane-dense (C, N) kernel layout.
        self.w1t = jnp.asarray(self.w1.T)   # (hidden, C)
        self.w2t = jnp.asarray(self.w2.T)   # (C, hidden)

    @staticmethod
    def sigma_t(t):
        return math.sqrt(-math.expm1(-2.0 * t))

    def prior_sample(self, shape, key):
        # p_T = N(0, sigma_t(1)^2 Id), NCHW shape.
        return jax.random.normal(key, shape, jnp.float32) * self.sigma_t(1.0)

    def forward(self, x_init, timesteps, key, pack_k=None, tile_n=None, stochastic=True):
        """Sample the backward SDE with the Euler method (returns the final state, NCHW).

        x_init : NCHW array (sample from p_T) or a shape tuple (B, C, H, W).
        timesteps : decreasing 1-D array of times, shape (n_steps+1,).
        """
        if isinstance(x_init, (tuple, list)):
            key, sub = jax.random.split(key)
            x = self.prior_sample(tuple(x_init), sub)
        else:
            x = jnp.asarray(x_init, jnp.float32)

        bsz, c, h, w = x.shape
        n = bsz * h * w
        pack_k = _pick_pack_k(c, n, pack_k)
        tile_n = _pick_tile_n(n // pack_k, tile_n)

        key, sub = jax.random.split(key)
        timesteps = jnp.asarray(timesteps, jnp.float32)
        return _sample_backward_sde(x, timesteps, sub, self.w1t, self.w2t,
                                    pack_k=pack_k, tile_n=tile_n, stochastic=stochastic)


# -----------------------------------------------------------------------------
# Pure-JAX reference (noise-free trajectory) for the correctness check
# -----------------------------------------------------------------------------
def _ref_backward_euler(x_nchw, timesteps, w1, w2, g=_SQRT2):
    bsz, c, h, w = x_nchw.shape
    x = jnp.transpose(x_nchw, (0, 2, 3, 1)).reshape(-1, c).astype(jnp.float32)
    w1b = jnp.asarray(w1, jnp.float32).astype(jnp.bfloat16)
    w2b = jnp.asarray(w2, jnp.float32).astype(jnp.bfloat16)
    ts = [float(t) for t in timesteps]
    for i in range(len(ts) - 1):
        t, dt = ts[i], ts[i + 1] - ts[i]
        sigma2 = -math.expm1(-2.0 * t)
        sigma = math.sqrt(sigma2)
        hh = jnp.maximum(jnp.dot(x.astype(jnp.bfloat16), w1b,
                                 preferred_element_type=jnp.float32), 0.0)
        mlp = jnp.dot(hh.astype(jnp.bfloat16), w2b, preferred_element_type=jnp.float32)
        den = mlp / (1.0 + sigma)
        score = (math.exp(-t) * den - x) / sigma2
        drift_b = x + g * g * score
        x = x + drift_b * dt                     # noise term disabled for the check
    return jnp.transpose(x.reshape(bsz, h, w, c), (0, 3, 1, 2))


if __name__ == "__main__":
    B, C, H, W = 2, 4, 16, 16
    HIDDEN = 32
    key = jax.random.PRNGKey(0)
    k_model, k_run, k_det = jax.random.split(key, 3)

    sde = DiffusionSDEPallas(channels=C, hidden=HIDDEN, key=k_model)
    timesteps = jnp.linspace(1.0, 0.05, 9)   # backward-time grid, stays away from t=0

    # 1) Full stochastic backward-SDE sampling (x_init given as a shape -> prior sample).
    out = sde.forward((B, C, H, W), timesteps, key=k_run)
    out = jax.block_until_ready(out)
    assert out.shape == (B, C, H, W)
    assert bool(jnp.all(jnp.isfinite(out)))

    # 2) Deterministic (noise disabled) multi-step trajectory vs a pure-JAX reference,
    #    forcing 2 tiles to exercise the parallel tile axis + VMEM-resident state.
    x0 = jax.random.normal(k_det, (B, C, H, W), jnp.float32)
    want = _ref_backward_euler(x0, timesteps, sde.w1, sde.w2)
    got = sde.forward(x0, timesteps, key=k_det, pack_k=2, tile_n=128, stochastic=False)
    got, want = jax.block_until_ready((got, want))
    assert got.shape == want.shape
    err = float(jnp.max(jnp.abs(got - want)))
    assert jnp.allclose(got, want, atol=5e-3, rtol=1e-3), f"mismatch vs reference: {err}"

    # 3) Same check with the auto-selected packing / tiling (pack_k=4, single tile).
    got2 = sde.forward(x0, timesteps, key=k_det, stochastic=False)
    got2 = jax.block_until_ready(got2)
    err2 = float(jnp.max(jnp.abs(got2 - want)))
    assert jnp.allclose(got2, want, atol=5e-3, rtol=1e-3), f"mismatch vs reference: {err2}"

    # 4) Stochastic mode actually injects noise (differs from the deterministic trajectory).
    got_s = sde.forward(x0, timesteps, key=k_det, stochastic=True)
    got_s = jax.block_until_ready(got_s)
    assert bool(jnp.all(jnp.isfinite(got_s)))
    assert float(jnp.max(jnp.abs(got_s - got2))) > 1e-2

    print("KERNEL_OK")
</pallas_src>

<mosaic_0001>
module attributes {stable_mosaic.version = 11 : i64} {
  func.func @_step_kernel(%arg0: i32, %arg1: i32, %arg2: memref<8xf32, #tpu.memory_space<smem>>, %arg3: memref<8xf32, #tpu.memory_space<smem>>, %arg4: memref<16x128xf32, #tpu.memory_space<vmem>>, %arg5: memref<128x16xbf16, #tpu.memory_space<vmem>>, %arg6: memref<16x128xbf16, #tpu.memory_space<vmem>>, %arg7: memref<8xf32, #tpu.memory_space<smem>>, %arg8: memref<1x16x128xf32, #tpu.memory_space<vmem>>, %arg9: memref<16x128xf32, #tpu.memory_space<vmem>>) attributes {dimension_semantics = [#tpu.dimension_semantics<parallel>, #tpu.dimension_semantics<arbitrary>], iteration_bounds = array<i64: 1, 8>, scalar_prefetch = 0 : i64, scratch_operands = 0 : i64, tpu.core_type = #tpu.core_type<tc>, window_params = [{transform_indices = @transform_0, window_bounds = array<i64: 8>}, {transform_indices = @transform_1, window_bounds = array<i64: 8>}, {transform_indices = @transform_2, window_bounds = array<i64: 16, 128>}, {pipeline_mode = #tpu.pipeline_mode<synchronous>, transform_indices = @transform_3, window_bounds = array<i64: 128, 16>}, {pipeline_mode = #tpu.pipeline_mode<synchronous>, transform_indices = @transform_4, window_bounds = array<i64: 16, 128>}, {transform_indices = @transform_5, window_bounds = array<i64: 8>}, {transform_indices = @transform_6, window_bounds = array<i64: 1, 16, 128>}, {transform_indices = @transform_7, window_bounds = array<i64: 16, 128>}]} {
    %c0_i32 = arith.constant 0 : i32
    %0 = arith.cmpi eq, %arg1, %c0_i32 : i32
    %1 = arith.extui %0 : i1 to i32
    %c0_i32_0 = arith.constant 0 : i32
    %2 = arith.cmpi ne, %1, %c0_i32_0 : i32
    scf.if %2 {
      %c0_13 = arith.constant 0 : index
      %c0_14 = arith.constant 0 : index
      %29 = vector.load %arg4[%c0_13, %c0_14] : memref<16x128xf32, #tpu.memory_space<vmem>>, vector<16x128xf32>
      %c0_15 = arith.constant 0 : index
      %c0_16 = arith.constant 0 : index
      %30 = vector.load %arg9[%c0_15, %c0_16] : memref<16x128xf32, #tpu.memory_space<vmem>>, vector<16x128xf32>
      tpu.vector_store %arg9[%c0_15, %c0_16], %29 {strides = array<i32>} : memref<16x128xf32, #tpu.memory_space<vmem>>, vector<16x128xf32>,
    } else {
    }
    %c0 = arith.constant 0 : index
    %c0_1 = arith.constant 0 : index
    %3 = vector.load %arg9[%c0, %c0_1] : memref<16x128xf32, #tpu.memory_space<vmem>>, vector<16x128xf32>
    %c0_2 = arith.constant 0 : index
    %c0_3 = arith.constant 0 : index
    %4 = vector.load %arg5[%c0_2, %c0_3] : memref<128x16xbf16, #tpu.memory_space<vmem>>, vector<128x16xbf16>
    %5 = arith.truncf %3 : vector<16x128xf32> to vector<16x128xbf16>
    %cst = arith.constant dense<0.000000e+00> : vector<128x128xf32>
    %6 = tpu.matmul %4, %5, %cst {dimension_numbers = #tpu.dot_dimension_numbers<[1], [0], [0], [1], [0, 0, 1, 1], [], []>} : vector<128x16xbf16>, vector<16x128xbf16>, vector<128x128xf32> -> vector<128x128xf32>
    %cst_4 = arith.constant 0.000000e+00 : f32
    %7 = vector.broadcast %cst_4 : f32 to vector<128x128xf32>
    %8 = arith.maximumf %6, %7 : vector<128x128xf32>
    %c0_5 = arith.constant 0 : index
    %c0_6 = arith.constant 0 : index
    %9 = vector.load %arg6[%c0_5, %c0_6] : memref<16x128xbf16, #tpu.memory_space<vmem>>, vector<16x128xbf16>
    %10 = arith.truncf %8 : vector<128x128xf32> to vector<128x128xbf16>
    %cst_7 = arith.constant dense<0.000000e+00> : vector<16x128xf32>
    %11 = tpu.matmul %9, %10, %cst_7 {dimension_numbers = #tpu.dot_dimension_numbers<[1], [0], [0], [1], [0, 0, 1, 1], [], []>} : vector<16x128xbf16>, vector<128x128xbf16>, vector<16x128xf32> -> vector<16x128xf32>
    %12 = arith.index_cast %arg1 : i32 to index
    %13 = memref.load %arg2[%12] : memref<8xf32, #tpu.memory_space<smem>>
    %14 = vector.broadcast %13 : f32 to vector<16x128xf32>
    %15 = arith.mulf %14, %3 : vector<16x128xf32>
    %16 = arith.index_cast %arg1 : i32 to index
    %17 = memref.load %arg3[%16] : memref<8xf32, #tpu.memory_space<smem>>
    %18 = vector.broadcast %17 : f32 to vector<16x128xf32>
    %19 = arith.mulf %18, %11 : vector<16x128xf32>
    %20 = arith.addf %15, %19 : vector<16x128xf32>
    %21 = arith.index_cast %arg1 : i32 to index
    %22 = memref.load %arg7[%21] : memref<8xf32, #tpu.memory_space<smem>>
    %c0_8 = arith.constant 0 : index
    %c0_9 = arith.constant 0 : index
    %c0_10 = arith.constant 0 : index
    %23 = vector.load %arg8[%c0_8, %c0_9, %c0_10] : memref<1x16x128xf32, #tpu.memory_space<vmem>>, vector<1x16x128xf32>
    %24 = vector.shape_cast %23 : vector<1x16x128xf32> to vector<16x128xf32>
    %25 = vector.broadcast %22 : f32 to vector<16x128xf32>
    %26 = arith.mulf %25, %24 : vector<16x128xf32>
    %27 = arith.addf %20, %26 : vector<16x128xf32>
    %c0_11 = arith.constant 0 : index
    %c0_12 = arith.constant 0 : index
    %28 = vector.load %arg9[%c0_11, %c0_12] : memref<16x128xf32, #tpu.memory_space<vmem>>, vector<16x128xf32>
    tpu.vector_store %arg9[%c0_11, %c0_12], %27 {strides = array<i32>} : memref<16x128xf32, #tpu.memory_space<vmem>>, vector<16x128xf32>,
    return
  }
  func.func @transform_0(%arg0: i32, %arg1: i32) -> i32 {
    %c0_i32 = arith.constant 0 : i32
    %c0_i32_0 = arith.constant 0 : i32
    return %c0_i32 : i32
  }
  func.func @transform_1(%arg0: i32, %arg1: i32) -> i32 {
    %c0_i32 = arith.constant 0 : i32
    %c0_i32_0 = arith.constant 0 : i32
    return %c0_i32 : i32
  }
  func.func @transform_2(%arg0: i32, %arg1: i32) -> (i32, i32) {
    %c0_i32 = arith.constant 0 : i32
    %c0_i32_0 = arith.constant 0 : i32
    return %c0_i32, %arg0 : i32, i32
  }
  func.func @transform_3(%arg0: i32, %arg1: i32) -> (i32, i32) {
    %c0_i32 = arith.constant 0 : i32
    %c0_i32_0 = arith.constant 0 : i32
    %c0_i32_1 = arith.constant 0 : i32
    return %c0_i32, %c0_i32_0 : i32, i32
  }
  func.func @transform_4(%arg0: i32, %arg1: i32) -> (i32, i32) {
    %c0_i32 = arith.constant 0 : i32
    %c0_i32_0 = arith.constant 0 : i32
    %c0_i32_1 = arith.constant 0 : i32
    return %c0_i32, %c0_i32_0 : i32, i32
  }
  func.func @transform_5(%arg0: i32, %arg1: i32) -> i32 {
    %c0_i32 = arith.constant 0 : i32
    %c0_i32_0 = arith.constant 0 : i32
    return %c0_i32 : i32
  }
  func.func @transform_6(%arg0: i32, %arg1: i32) -> (i32, i32, i32) {
    %c0_i32 = arith.constant 0 : i32
    %c0_i32_0 = arith.constant 0 : i32
    return %arg1, %c0_i32, %arg0 : i32, i32, i32
  }
  func.func @transform_7(%arg0: i32, %arg1: i32) -> (i32, i32) {
    %c0_i32 = arith.constant 0 : i32
    %c0_i32_0 = arith.constant 0 : i32
    return %c0_i32, %arg0 : i32, i32
  }
}

</mosaic_0001>

<llo_original>
// kernel: _sample_backward_sde.1
$region0: #{_sample_backward_sde.1}
  #allocation0 [shape = 'u32[]', space=smem, size = 0x4, offset = 0x4, fixed_abs, tag = 'smem constant byte address 0x4 - core index']
  #allocation1 [shape = 'u32[144,128]{1,0:T(1,128)}', space=vmem, size = 0x12000, scoped, tag = 'internal scratch']
  %s0 = inlined_call_operand.vmem [shape: f32[8], index: 0, kind: input, shape index: {}]
  %s1 = inlined_call_operand.vmem [shape: f32[8], index: 1, kind: input, shape index: {}]
  %s2 = inlined_call_operand.vmem [shape: f32[16,128], index: 2, kind: input, shape index: {}]
  %s3 = inlined_call_operand.vmem [shape: bf16[128,16], index: 3, kind: input, shape index: {}]
  %s4 = inlined_call_operand.vmem [shape: bf16[16,128], index: 4, kind: input, shape index: {}]
  %s5 = inlined_call_operand.vmem [shape: f32[8], index: 5, kind: input, shape index: {}]
  %s6 = inlined_call_operand.vmem [shape: f32[8,16,128], index: 6, kind: input, shape index: {}]
  %s7 = inlined_call_operand.vmem [shape: f32[16,128], index: 7, kind: output, shape index: {}]
  %s8 = sld [smem:[#allocation0]]
  $region77: #{_sample_backward_sde.1} parent=0
    _
  %s10 = ssub.s32 1, %s8
  %s11 = scalar_select 0, %s10, %s8
  $region1: #{_sample_backward_sde.1} parent=0
    #allocation2 [shape = 'u8[512]{0}', space=smem, size = 0x200, scoped, tag = 'input window, operand 0, single buffered']
    #allocation3 [shape = 's32[2]{0}', space=sflag, size = 0x8, scoped, tag = 'scoped memory for _sample_backward_sde.1']
    #allocation4 [shape = 'u8[512]{0}', space=smem, size = 0x200, scoped, tag = 'input window, operand 1, single buffered']
    #allocation5 [shape = 's32[1]{0}', space=sflag, size = 0x4, scoped, tag = 'scoped memory for _sample_backward_sde.1']
    #allocation6 [shape = 'u8[512]{0}', space=smem, size = 0x200, scoped, tag = 'input window, operand 5, single buffered']
    %12 = vsyncpa [#allocation3], 0
    %13 = vsyncpa [#allocation5], 0
    loop: start=0, step=1, limit=10
    $region2: #{_sample_backward_sde.1} parent=1 // loop_pre_header
      _
    $region3: #{_sample_backward_sde.1} parent=1 // loop_header
      %s15 = sphi 0, %s19
      %p16 = scmp.ge.s32.totalorder %s15, 10
      %s22 = sphi 0, %s34
      %s23 = sphi 0, %s30
      %s24 = sphi 0, %s22
      %s25 = sphi 0, %s23
      %s26 = sphi 0, %s24
      %s27 = sphi 0, %s25
      %s35 = sphi 0, %s35
      %s37 = sphi 0, %s35
      %s38 = sphi 0, %s37
      %s52 = sphi 0, %s38
      %s56 = sphi 0, %s56
      %s58 = sphi 0, %s56
      %s59 = sphi 0, %s58
      %s73 = sphi 0, %s59
      %s79 = sphi 0, %s81
      %s82 = sphi 0, %s79
      %s83 = sphi 0, %s82
      %s99 = sphi 0, %s83
      %s103 = sphi 0, %s103
      %s105 = sphi 0, %s103
      %s106 = sphi 0, %s105
      %s120 = sphi 0, %s106
      %s124 = sphi 0, %s124
      %s126 = sphi 0, %s124
      %s127 = sphi 0, %s126
      %s141 = sphi 0, %s127
      %s145 = sphi 0, %s145
      %s147 = sphi 0, %s145
      %s148 = sphi 0, %s147
      %s162 = sphi 0, %s148
      %s170 = sphi 0, %s172
      %s173 = sphi 0, %s170
      %s174 = sphi 0, %s173
      %s190 = sphi 0, %s174
      %s196 = sphi 0, %s198
      %s199 = sphi 0, %s196
      %s200 = sphi 0, %s199
      %s216 = sphi 0, %s200
    $region4: #{_sample_backward_sde.1} parent=1 // loop_header_branch
      %18 = sbr.rel (%p16) target = $region8
    $region5: #{_sample_backward_sde.1} parent=1 // loop_body
      %s20 = ssub.s32 %s15, 1
      %s21 = ssub.s32 %s15, 2
      %s28 = sadd.s32 1, %s23
      %p29 = scmp.ge.s32.totalorder %s28, 8
      %s30 = scalar_select %p29, 0, %s28
      %s31 = sadd.s32 1, %s22
      %s32 = scalar_select %p29, %s31, %s22
      %p33 = scmp.ge.s32.totalorder %s32, 1
      %s34 = scalar_select %p33, 0, %s32
      %s36 = sadd.s32 %s35, 1
      %p39 = scmp.eq.s32.totalorder %s15, 7
      %p40 = scmp.ne.s32.totalorder %s35, %s37
      %p41 = scmp.eq.s32.totalorder %s15, 0
      %p42 = por %p40, %p41
      %p43 = scmp.ne.s32.totalorder %s35, %s37
      %p44 = scmp.eq.s32.totalorder %s20, 7
      %p45 = por %p43, %p44
      %p46 = scmp.ne.s32.totalorder %s37, %s38
      %p47 = scmp.eq.s32.totalorder %s20, 0
      %p48 = por %p46, %p47
      %p49 = scmp.ne.s32.totalorder %s37, %s38
      %p50 = scmp.eq.s32.totalorder %s21, 7
      %p51 = por %p49, %p50
      %p53 = scmp.ne.s32.totalorder %s38, %s52
      %p54 = scmp.eq.s32.totalorder %s21, 0
      %p55 = por %p53, %p54
      %s57 = sadd.s32 %s56, 1
      %p60 = scmp.eq.s32.totalorder %s15, 7
      %p61 = scmp.ne.s32.totalorder %s56, %s58
      %p62 = scmp.eq.s32.totalorder %s15, 0
      %p63 = por %p61, %p62
      %p64 = scmp.ne.s32.totalorder %s56, %s58
      %p65 = scmp.eq.s32.totalorder %s20, 7
      %p66 = por %p64, %p65
      %p67 = scmp.ne.s32.totalorder %s58, %s59
      %p68 = scmp.eq.s32.totalorder %s20, 0
      %p69 = por %p67, %p68
      %p70 = scmp.ne.s32.totalorder %s58, %s59
      %p71 = scmp.eq.s32.totalorder %s21, 7
      %p72 = por %p70, %p71
      %p74 = scmp.ne.s32.totalorder %s59, %s73
      %p75 = scmp.eq.s32.totalorder %s21, 0
      %p76 = por %p74, %p75
      %s77 = ssub.s32 %s22, %s34
      %p78 = scmp.eq.s32.totalorder %s77, 0
      %s80 = sadd.s32 %s79, 1
      %s81 = scalar_select %p78, %s79, %s80
      %p84 = pneg %p78
      %p85 = scmp.eq.s32.totalorder %s15, 7
      %p86 = por %p84, %p85
      %p87 = scmp.ne.s32.totalorder %s79, %s82
      %p88 = scmp.eq.s32.totalorder %s15, 0
      %p89 = por %p87, %p88
      %p90 = scmp.ne.s32.totalorder %s79, %s82
      %p91 = scmp.eq.s32.totalorder %s20, 7
      %p92 = por %p90, %p91
      %p93 = scmp.ne.s32.totalorder %s82, %s83
      %p94 = scmp.eq.s32.totalorder %s20, 0
      %p95 = por %p93, %p94
      %p96 = scmp.ne.s32.totalorder %s82, %s83
      %p97 = scmp.eq.s32.totalorder %s21, 7
      %p98 = por %p96, %p97
      %p100 = scmp.ne.s32.totalorder %s83, %s99
      %p101 = scmp.eq.s32.totalorder %s21, 0
      %p102 = por %p100, %p101
      %s104 = sadd.s32 %s103, 1
      %p107 = scmp.eq.s32.totalorder %s15, 7
      %p108 = scmp.ne.s32.totalorder %s103, %s105
      %p109 = scmp.eq.s32.totalorder %s15, 0
      %p110 = por %p108, %p109
      %p111 = scmp.ne.s32.totalorder %s103, %s105
      %p112 = scmp.eq.s32.totalorder %s20, 7
      %p113 = por %p111, %p112
      %p114 = scmp.ne.s32.totalorder %s105, %s106
      %p115 = scmp.eq.s32.totalorder %s20, 0
      %p116 = por %p114, %p115
      %p117 = scmp.ne.s32.totalorder %s105, %s106
      %p118 = scmp.eq.s32.totalorder %s21, 7
      %p119 = por %p117, %p118
      %p121 = scmp.ne.s32.totalorder %s106, %s120
      %p122 = scmp.eq.s32.totalorder %s21, 0
      %p123 = por %p121, %p122
      %s125 = sadd.s32 %s124, 1
      %p128 = scmp.eq.s32.totalorder %s15, 7
      %p129 = scmp.ne.s32.totalorder %s124, %s126
      %p130 = scmp.eq.s32.totalorder %s15, 0
      %p131 = por %p129, %p130
      %p132 = scmp.ne.s32.totalorder %s124, %s126
      %p133 = scmp.eq.s32.totalorder %s20, 7
      %p134 = por %p132, %p133
      %p135 = scmp.ne.s32.totalorder %s126, %s127
      %p136 = scmp.eq.s32.totalorder %s20, 0
      %p137 = por %p135, %p136
      %p138 = scmp.ne.s32.totalorder %s126, %s127
      %p139 = scmp.eq.s32.totalorder %s21, 7
      %p140 = por %p138, %p139
      %p142 = scmp.ne.s32.totalorder %s127, %s141
      %p143 = scmp.eq.s32.totalorder %s21, 0
      %p144 = por %p142, %p143
      %s146 = sadd.s32 %s145, 1
      %p149 = scmp.eq.s32.totalorder %s15, 7
      %p150 = scmp.ne.s32.totalorder %s145, %s147
      %p151 = scmp.eq.s32.totalorder %s15, 0
      %p152 = por %p150, %p151
      %p153 = scmp.ne.s32.totalorder %s145, %s147
      %p154 = scmp.eq.s32.totalorder %s20, 7
      %p155 = por %p153, %p154
      %p156 = scmp.ne.s32.totalorder %s147, %s148
      %p157 = scmp.eq.s32.totalorder %s20, 0
      %p158 = por %p156, %p157
      %p159 = scmp.ne.s32.totalorder %s147, %s148
      %p160 = scmp.eq.s32.totalorder %s21, 7
      %p161 = por %p159, %p160
      %p163 = scmp.ne.s32.totalorder %s148, %s162
      %p164 = scmp.eq.s32.totalorder %s21, 0
      %p165 = por %p163, %p164
      %s166 = ssub.s32 %s23, %s30
      %s167 = ssub.s32 %s22, %s34
      %s168 = sor.u32 %s166, %s167
      %p169 = scmp.eq.s32.totalorder %s168, 0
      %s171 = sadd.s32 %s170, 1
      %s172 = scalar_select %p169, %s170, %s171
      %p175 = pneg %p169
      %p176 = scmp.eq.s32.totalorder %s15, 7
      %p177 = por %p175, %p176
      %p178 = scmp.ne.s32.totalorder %s170, %s173
      %p179 = scmp.eq.s32.totalorder %s15, 0
      %p180 = por %p178, %p179
      %p181 = scmp.ne.s32.totalorder %s170, %s173
      %p182 = scmp.eq.s32.totalorder %s20, 7
      %p183 = por %p181, %p182
      %p184 = scmp.ne.s32.totalorder %s173, %s174
      %p185 = scmp.eq.s32.totalorder %s20, 0
      %p186 = por %p184, %p185
      %p187 = scmp.ne.s32.totalorder %s173, %s174
      %p188 = scmp.eq.s32.totalorder %s21, 7
      %p189 = por %p187, %p188
      %p191 = scmp.ne.s32.totalorder %s174, %s190
      %p192 = scmp.eq.s32.totalorder %s21, 0
      %p193 = por %p191, %p192
      %s194 = ssub.s32 %s22, %s34
      %p195 = scmp.eq.s32.totalorder %s194, 0
      %s197 = sadd.s32 %s196, 1
      %s198 = scalar_select %p195, %s196, %s197
      %p201 = pneg %p195
      %p202 = scmp.eq.s32.totalorder %s15, 7
      %p203 = por %p201, %p202
      %p204 = scmp.ne.s32.totalorder %s196, %s199
      %p205 = scmp.eq.s32.totalorder %s15, 0
      %p206 = por %p204, %p205
      %p207 = scmp.ne.s32.totalorder %s196, %s199
      %p208 = scmp.eq.s32.totalorder %s20, 7
      %p209 = por %p207, %p208
      %p210 = scmp.ne.s32.totalorder %s199, %s200
      %p211 = scmp.eq.s32.totalorder %s20, 0
      %p212 = por %p210, %p211
      %p213 = scmp.ne.s32.totalorder %s199, %s200
      %p214 = scmp.eq.s32.totalorder %s21, 7
      %p215 = por %p213, %p214
      %p217 = scmp.ne.s32.totalorder %s200, %s216
      %p218 = scmp.eq.s32.totalorder %s21, 0
      %p219 = por %p217, %p218
      %p220 = scmp.le.s32.totalorder 1, %s15
      %p221 = scmp.lt.s32.totalorder %s15, 9
      %p222 = pnand %p220, %p221
      %p223 = pneg %p222
      // Predicated region
      $region9: #{_sample_backward_sde.1} parent=5 // pred_check
        _
      $region10: #{_sample_backward_sde.1} parent=5 // pred_check_branch
        %225 = sbr.rel (%p222) target = $region12
      $region11: #{_sample_backward_sde.1} parent=5 // pred_region
        %s226 = ssub.s32 %s15, 1
        // Predicated region
        $region13: #{_sample_backward_sde.1} parent=11 // pred_check
          %p227 = pneg %p48
        $region14: #{_sample_backward_sde.1} parent=11 // pred_check_branch
          %229 = sbr.rel (%p227) target = $region16
        $region15: #{_sample_backward_sde.1} parent=11 // pred_region
          %s231 = ssub.s32 16, 16
          %232 = vsyncadd [#allocation3], %s231
          %s234 = sshll.u32 %s0, 4
          %s235 = int_to_ptr.vmem [resolvable:$true] %s234
          %237 = dma.vmem_to_smem %s235, 16, [#allocation2], [#allocation3]
        $region16: #{_sample_backward_sde.1} parent=11 // pred_fallthru
          _
        // Predicated region
        $region17: #{_sample_backward_sde.1} parent=11 // pred_check
          %p238 = pneg %p69
        $region18: #{_sample_backward_sde.1} parent=11 // pred_check_branch
          %240 = sbr.rel (%p238) target = $region20
        $region19: #{_sample_backward_sde.1} parent=11 // pred_region
          %s242 = ssub.s32 16, 16
          %243 = vsyncadd [#allocation5], %s242
          %s245 = sshll.u32 %s1, 4
          %s246 = int_to_ptr.vmem [resolvable:$true] %s245
          %248 = dma.vmem_to_smem %s246, 16, [#allocation4], [#allocation5]
        $region20: #{_sample_backward_sde.1} parent=11 // pred_fallthru
          _
        // Predicated region
        $region21: #{_sample_backward_sde.1} parent=11 // pred_check
          %p249 = pneg %p95
        $region22: #{_sample_backward_sde.1} parent=11 // pred_check_branch
          %251 = sbr.rel (%p249) target = $region24
        $region23: #{_sample_backward_sde.1} parent=11 // pred_region
          %p252 = scmp.lt.s32.totalorder %s24, 0
          %s253 = scalar_select %p252, %s24, 0
          %s254 = smul.addr %s253, 8
          %s255 = scalar_lea.vmem %s2, %s254
        $region24: #{_sample_backward_sde.1} parent=11 // pred_fallthru
          _
        // Predicated region
        $region25: #{_sample_backward_sde.1} parent=11 // pred_check
          %p256 = pneg %p116
        $region26: #{_sample_backward_sde.1} parent=11 // pred_check_branch
          %258 = sbr.rel (%p256) target = $region28
        $region27: #{_sample_backward_sde.1} parent=11 // pred_region
          _
        $region28: #{_sample_backward_sde.1} parent=11 // pred_fallthru
          _
        // Predicated region
        $region29: #{_sample_backward_sde.1} parent=11 // pred_check
          %p259 = pneg %p137
        $region30: #{_sample_backward_sde.1} parent=11 // pred_check_branch
          %261 = sbr.rel (%p259) target = $region32
        $region31: #{_sample_backward_sde.1} parent=11 // pred_region
          _
        $region32: #{_sample_backward_sde.1} parent=11 // pred_fallthru
          _
        // Predicated region
        $region33: #{_sample_backward_sde.1} parent=11 // pred_check
          %p262 = pneg %p158
        $region34: #{_sample_backward_sde.1} parent=11 // pred_check_branch
          %264 = sbr.rel (%p262) target = $region36
        $region35: #{_sample_backward_sde.1} parent=11 // pred_region
          %s266 = ssub.s32 16, 16
          %267 = vsyncadd [#allocation5], %s266
          %s269 = sshll.u32 %s5, 4
          %s270 = int_to_ptr.vmem [resolvable:$true] %s269
          %272 = dma.vmem_to_smem %s270, 16, [#allocation6], [#allocation5]
        $region36: #{_sample_backward_sde.1} parent=11 // pred_fallthru
          _
      $region12: #{_sample_backward_sde.1} parent=5 // pred_fallthru
        _
      %p273 = scmp.lt.s32.totalorder %s15, 8
      // Predicated region
      $region37: #{_sample_backward_sde.1} parent=5 // pred_check
        %p274 = pneg %p273
      $region38: #{_sample_backward_sde.1} parent=5 // pred_check_branch
        %276 = sbr.rel (%p274) target = $region40
      $region39: #{_sample_backward_sde.1} parent=5 // pred_region
        // Predicated region
        $region41: #{_sample_backward_sde.1} parent=39 // pred_check
          %p277 = pneg %p180
        $region42: #{_sample_backward_sde.1} parent=39 // pred_check_branch
          %279 = sbr.rel (%p277) target = $region44
        $region43: #{_sample_backward_sde.1} parent=39 // pred_region
          %p280 = scmp.lt.s32.totalorder %s23, 7
          %s281 = scalar_select %p280, %s23, 7
          %p282 = scmp.lt.s32.totalorder %s22, 0
          %s283 = scalar_select %p282, %s22, 0
          %s284 = smul.addr %s281, 2
          %s285 = sadd.s32 %s283, %s284
          %s286 = smul.addr %s285, 8
          %s287 = scalar_lea.vmem %s6, %s286
        $region44: #{_sample_backward_sde.1} parent=39 // pred_fallthru
          _
      $region40: #{_sample_backward_sde.1} parent=5 // pred_fallthru
        _
      %p288 = scmp.le.s32.totalorder 1, %s15
      %p289 = scmp.lt.s32.totalorder %s15, 9
      %p290 = pnand %p288, %p289
      %p291 = pneg %p290
      // Predicated region
      $region45: #{_sample_backward_sde.1} parent=5 // pred_check
        _
      $region46: #{_sample_backward_sde.1} parent=5 // pred_check_branch
        %293 = sbr.rel (%p290) target = $region48
      $region47: #{_sample_backward_sde.1} parent=5 // pred_region
        %s294 = ssub.s32 %s15, 1
        // Predicated region
        $region49: #{_sample_backward_sde.1} parent=47 // pred_check
          %p295 = pneg %p48
        $region50: #{_sample_backward_sde.1} parent=47 // pred_check_branch
          %297 = sbr.rel (%p295) target = $region52
        $region51: #{_sample_backward_sde.1} parent=47 // pred_region
          %298 = dma.done [#allocation3], 16
        $region52: #{_sample_backward_sde.1} parent=47 // pred_fallthru
          _
        // Predicated region
        $region53: #{_sample_backward_sde.1} parent=47 // pred_check
          %p299 = pneg %p69
        $region54: #{_sample_backward_sde.1} parent=47 // pred_check_branch
          %301 = sbr.rel (%p299) target = $region56
        $region55: #{_sample_backward_sde.1} parent=47 // pred_region
          %302 = dma.done [#allocation5], 16
        $region56: #{_sample_backward_sde.1} parent=47 // pred_fallthru
          _
        // Predicated region
        $region57: #{_sample_backward_sde.1} parent=47 // pred_check
          %p303 = pneg %p158
        $region58: #{_sample_backward_sde.1} parent=47 // pred_check_branch
          %305 = sbr.rel (%p303) target = $region60
        $region59: #{_sample_backward_sde.1} parent=47 // pred_region
          %306 = dma.done [#allocation5], 16
        $region60: #{_sample_backward_sde.1} parent=47 // pred_fallthru
          _
        %307 = sfence
        %p308 = pneg %p48
        %p309 = pneg %p45
        %p310 = pneg %p69
        %p311 = pneg %p66
        %p312 = scmp.lt.s32.totalorder %s24, 0
        %s313 = scalar_select %p312, %s24, 0
        %s314 = smul.addr %s313, 8
        %s315 = scalar_lea.vmem %s2, %s314
        %p316 = pneg %p95
        %p317 = pneg %p92
        %p318 = pneg %p116
        %p319 = pneg %p113
        %p320 = pneg %p137
        %p321 = pneg %p134
        %p322 = pneg %p158
        %p323 = pneg %p155
        %p324 = scmp.lt.s32.totalorder %s25, 7
        %s325 = scalar_select %p324, %s25, 7
        %p326 = scmp.lt.s32.totalorder %s24, 0
        %s327 = scalar_select %p326, %s24, 0
        %s328 = smul.addr %s325, 2
        %s329 = sadd.s32 %s327, %s328
        %s330 = smul.addr %s329, 8
        %s331 = scalar_lea.vmem %s6, %s330
        %p332 = pneg %p186
        %p333 = pneg %p183
        %p334 = pneg %p212
        %p335 = pneg %p209
        %p336 = scmp.lt.s32.totalorder %s24, 0
        %s337 = scalar_select %p336, %s24, 0
        %s338 = smul.addr %s337, 8
        %s339 = scalar_lea.vmem %s7, %s338
        %p340 = scmp.lt.s32.totalorder %s24, 0
        %s341 = scalar_select %p340, %s24, 0
        %s342 = smul.addr %s341, 8
        %s343 = scalar_lea.vmem %s2, %s342
        %p344 = scmp.lt.s32.totalorder %s25, 7
        %s345 = scalar_select %p344, %s25, 7
        %p346 = scmp.lt.s32.totalorder %s24, 0
        %s347 = scalar_select %p346, %s24, 0
        %s348 = smul.addr %s345, 2
        %s349 = sadd.s32 %s347, %s348
        %s350 = smul.addr %s349, 8
        %s351 = scalar_lea.vmem %s6, %s350
        %p352 = scmp.lt.s32.totalorder %s24, 0
        %s353 = scalar_select %p352, %s24, 0
        %s354 = smul.addr %s353, 8
        %s355 = scalar_lea.vmem %s7, %s354
        %p357 = scmp.eq.s32.totalorder %s25, 0
        // Predicated region
        $region61: #{_sample_backward_sde.1} parent=47 // pred_check
          %p358 = pneg %p357
        $region62: #{_sample_backward_sde.1} parent=47 // pred_check_branch
          %360 = sbr.rel (%p358) target = $region64
        $region63: #{_sample_backward_sde.1} parent=47 // pred_region
          %v361 = vld [vmem:[%s343] sm:$0xff]
          %v362 = vld [vmem:[%s343 + $0x8] sm:$0xff]
          %363 = vst [vmem:[%s355] sm:$0xff] %v361
          %364 = vst [vmem:[%s355 + $0x8] sm:$0xff] %v362
        $region64: #{_sample_backward_sde.1} parent=47 // pred_fallthru
          _
        %v365 = vld [vmem:[%s355] sm:$0xff]
        %v366 = vld [vmem:[%s355 + $0x8] sm:$0xff]
        %v367 = vld [vmem:[%s3] sm:$0xf]
        %v368 = vld [vmem:[%s3 + $0x4] sm:$0xf]
        %v369 = vld [vmem:[%s3 + $0x8] sm:$0xf]
        %v370 = vld [vmem:[%s3 + $0xc] sm:$0xf]
        %v371 = vld [vmem:[%s3 + $0x10] sm:$0xf]
        %v372 = vld [vmem:[%s3 + $0x14] sm:$0xf]
        %v373 = vld [vmem:[%s3 + $0x18] sm:$0xf]
        %v374 = vld [vmem:[%s3 + $0x1c] sm:$0xf]
        %v375 = vld [vmem:[%s3 + $0x20] sm:$0xf]
        %v376 = vld [vmem:[%s3 + $0x24] sm:$0xf]
        %v377 = vld [vmem:[%s3 + $0x28] sm:$0xf]
        %v378 = vld [vmem:[%s3 + $0x2c] sm:$0xf]
        %v379 = vld [vmem:[%s3 + $0x30] sm:$0xf]
        %v380 = vld [vmem:[%s3 + $0x34] sm:$0xf]
        %v381 = vld [vmem:[%s3 + $0x38] sm:$0xf]
        %v382 = vld [vmem:[%s3 + $0x3c] sm:$0xf]
        %v383 = vpack.c.bf16 %v366, %v365
        %v400 = vunpack.c.l.b16 %v367
        %v401 = vunpack.c.l.b16 %v368
        %v402 = vunpack.c.l.b16 %v369
        %v403 = vunpack.c.l.b16 %v370
        %v404 = vunpack.c.l.b16 %v371
        %v405 = vunpack.c.l.b16 %v372
        %v406 = vunpack.c.l.b16 %v373
        %v407 = vunpack.c.l.b16 %v374
        %v408 = vunpack.c.l.b16 %v375
        %v409 = vunpack.c.l.b16 %v376
        %v410 = vunpack.c.l.b16 %v377
        %v411 = vunpack.c.l.b16 %v378
        %v412 = vunpack.c.l.b16 %v379
        %v413 = vunpack.c.l.b16 %v380
        %v414 = vunpack.c.l.b16 %v381
        %v415 = vunpack.c.l.b16 %v382
        %v416 = vpack.c.b16 %v401, %v400
        %v417 = vpack.c.b16 %v403, %v402
        %v418 = vpack.c.b16 %v405, %v404
        %v419 = vpack.c.b16 %v407, %v406
        %v420 = vpack.c.b16 %v409, %v408
        %v421 = vpack.c.b16 %v411, %v410
        %v422 = vpack.c.b16 %v413, %v412
        %v423 = vpack.c.b16 %v415, %v414
        %vm424 = vcmask 130048
        %v426 = vsel %vm424, %v416, 0
        %v429 = vsel %vm424, %v417, 0
        %v432 = vsel %vm424, %v418, 0
        %v435 = vsel %vm424, %v419, 0
        %v438 = vsel %vm424, %v420, 0
        %v441 = vsel %vm424, %v421, 0
        %v444 = vsel %vm424, %v422, 0
        %v447 = vsel %vm424, %v423, 0
        %449 = vmatprep.subr.bf16.mxu0 0
        %450 = vmatpush1.bf16.msra.mxu0 %v383
        %451 = vmatprep.subr.bf16.mxu0 0
        %452 = vmatpush1.bf16.msra.mxu0 0
        %453 = vmatprep.subr.bf16.mxu0 0
        %454 = vmatpush1.bf16.msra.mxu0 0
        %455 = vmatprep.subr.bf16.mxu0 0
        %456 = vmatpush1.bf16.msra.mxu0 0
        %457 = vmatprep.subr.bf16.mxu0 0
        %458 = vmatpush1.bf16.msra.mxu0 0
        %459 = vmatprep.subr.bf16.mxu0 0
        %460 = vmatpush1.bf16.msra.mxu0 0
        %461 = vmatprep.subr.bf16.mxu0 0
        %462 = vmatpush1.bf16.msra.mxu0 0
        %463 = vmatprep.subr.bf16.mxu0 0
        %464 = vmatpush1.bf16.msra.mxu0 0
        %465 = vmatprep.subr.bf16.mxu0 0
        %466 = vmatpush1.bf16.msra.mxu0 0
        %467 = vmatprep.subr.bf16.mxu0 0
        %468 = vmatpush1.bf16.msra.mxu0 0
        %469 = vmatprep.subr.bf16.mxu0 0
        %470 = vmatpush1.bf16.msra.mxu0 0
        %471 = vmatprep.subr.bf16.mxu0 0
        %472 = vmatpush1.bf16.msra.mxu0 0
        %473 = vmatprep.subr.bf16.mxu0 0
        %474 = vmatpush1.bf16.msra.mxu0 0
        %475 = vmatprep.subr.bf16.mxu0 0
        %476 = vmatpush1.bf16.msra.mxu0 0
        %477 = vmatprep.subr.bf16.mxu0 0
        %478 = vmatpush1.bf16.msra.mxu0 0
        %479 = vmatprep.subr.bf16.mxu0 0
        %480 = vmatpush1.bf16.msra.mxu0 0
        %481 = vmatprep.mubr.bf16.mxu0 0
        %482 = vmatmul.mubr.bf16.gmra.mrb[0].mxu0 %v426
        %v483 = vpop.f32.mrb[0].mxu0
        %v484 = vadd.f32 0.0, %v483
        %v485 = vpop.f32.mrb[0].mxu0
        %v486 = vpop.f32.mrb[0].mxu0
        %v487 = vadd.f32 0.0, %v486
        %v488 = vpop.f32.mrb[0].mxu0
        %489 = vmatprep.mubr.bf16.mxu0 0
        %490 = vmatmul.mubr.bf16.gmra.mrb[0].mxu0 %v429
        %v491 = vpop.f32.mrb[0].mxu0
        %v492 = vadd.f32 0.0, %v491
        %v493 = vpop.f32.mrb[0].mxu0
        %v494 = vpop.f32.mrb[0].mxu0
        %v495 = vadd.f32 0.0, %v494
        %v496 = vpop.f32.mrb[0].mxu0
        %497 = vmatprep.mubr.bf16.mxu0 0
        %498 = vmatmul.mubr.bf16.gmra.mrb[0].mxu0 %v432
        %v499 = vpop.f32.mrb[0].mxu0
        %v500 = vadd.f32 0.0, %v499
        %v501 = vpop.f32.mrb[0].mxu0
        %v502 = vpop.f32.mrb[0].mxu0
        %v503 = vadd.f32 0.0, %v502
        %v504 = vpop.f32.mrb[0].mxu0
        %505 = vmatprep.mubr.bf16.mxu0 0
        %506 = vmatmul.mubr.bf16.gmra.mrb[0].mxu0 %v435
        %v507 = vpop.f32.mrb[0].mxu0
        %v508 = vadd.f32 0.0, %v507
        %v509 = vpop.f32.mrb[0].mxu0
        %v510 = vpop.f32.mrb[0].mxu0
        %v511 = vadd.f32 0.0, %v510
        %v512 = vpop.f32.mrb[0].mxu0
        %513 = vmatprep.mubr.bf16.mxu0 0
        %514 = vmatmul.mubr.bf16.gmra.mrb[0].mxu0 %v438
        %v515 = vpop.f32.mrb[0].mxu0
        %v516 = vadd.f32 0.0, %v515
        %v517 = vpop.f32.mrb[0].mxu0
        %v518 = vpop.f32.mrb[0].mxu0
        %v519 = vadd.f32 0.0, %v518
        %v520 = vpop.f32.mrb[0].mxu0
        %521 = vmatprep.mubr.bf16.mxu0 0
        %522 = vmatmul.mubr.bf16.gmra.mrb[0].mxu0 %v441
        %v523 = vpop.f32.mrb[0].mxu0
        %v524 = vadd.f32 0.0, %v523
        %v525 = vpop.f32.mrb[0].mxu0
        %v526 = vpop.f32.mrb[0].mxu0
        %v527 = vadd.f32 0.0, %v526
        %v528 = vpop.f32.mrb[0].mxu0
        %529 = vmatprep.mubr.bf16.mxu0 0
        %530 = vmatmul.mubr.bf16.gmra.mrb[0].mxu0 %v444
        %v531 = vpop.f32.mrb[0].mxu0
        %v532 = vadd.f32 0.0, %v531
        %v533 = vpop.f32.mrb[0].mxu0
        %v534 = vpop.f32.mrb[0].mxu0
        %v535 = vadd.f32 0.0, %v534
        %v536 = vpop.f32.mrb[0].mxu0
        %537 = vmatprep.mubr.bf16.mxu0 0
        %538 = vmatmul.mubr.bf16.gmra.mrb[0].mxu0 %v447
        %v539 = vpop.f32.mrb[0].mxu0
        %v540 = vadd.f32 0.0, %v539
        %v541 = vpop.f32.mrb[0].mxu0
        %v542 = vpop.f32.mrb[0].mxu0
        %v543 = vadd.f32 0.0, %v542
        %v544 = vpop.f32.mrb[0].mxu0
        %545 = vdwg.mxu0
        %v546 = vmax.f32 %v484, 0.0
        %v547 = vmax.f32 %v487, 0.0
        %v548 = vmax.f32 %v492, 0.0
        %v549 = vmax.f32 %v495, 0.0
        %v550 = vmax.f32 %v500, 0.0
        %v551 = vmax.f32 %v503, 0.0
        %v552 = vmax.f32 %v508, 0.0
        %v553 = vmax.f32 %v511, 0.0
        %v554 = vmax.f32 %v516, 0.0
        %v555 = vmax.f32 %v519, 0.0
        %v556 = vmax.f32 %v524, 0.0
        %v557 = vmax.f32 %v527, 0.0
        %v558 = vmax.f32 %v532, 0.0
        %v559 = vmax.f32 %v535, 0.0
        %v560 = vmax.f32 %v540, 0.0
        %v561 = vmax.f32 %v543, 0.0
        %v562 = vld [vmem:[%s4] sm:$0xf]
        %v563 = vld [vmem:[%s4 + $0x4] sm:$0xf]
        %v564 = vpack.c.bf16 %v547, %v546
        %v565 = vpack.c.bf16 %v549, %v548
        %v566 = vpack.c.bf16 %v551, %v550
        %v567 = vpack.c.bf16 %v553, %v552
        %v568 = vpack.c.bf16 %v555, %v554
        %v569 = vpack.c.bf16 %v557, %v556
        %v570 = vpack.c.bf16 %v559, %v558
        %v571 = vpack.c.bf16 %v561, %v560
        %v574 = vunpack.c.l.b16 %v562
        %v575 = vunpack.c.l.b16 %v563
        %v576 = vpack.c.b16 %v575, %v574
        %578 = vmatprep.subr.bf16.mxu0 0
        %579 = vmatpush1.bf16.msra.mxu0 %v564
        %580 = vmatprep.subr.bf16.mxu0 0
        %581 = vmatpush1.bf16.msra.mxu0 %v565
        %582 = vmatprep.subr.bf16.mxu0 0
        %583 = vmatpush1.bf16.msra.mxu0 %v566
        %584 = vmatprep.subr.bf16.mxu0 0
        %585 = vmatpush1.bf16.msra.mxu0 %v567
        %586 = vmatprep.subr.bf16.mxu0 0
        %587 = vmatpush1.bf16.msra.mxu0 %v568
        %588 = vmatprep.subr.bf16.mxu0 0
        %589 = vmatpush1.bf16.msra.mxu0 %v569
        %590 = vmatprep.subr.bf16.mxu0 0
        %591 = vmatpush1.bf16.msra.mxu0 %v570
        %592 = vmatprep.subr.bf16.mxu0 0
        %593 = vmatpush1.bf16.msra.mxu0 %v571
        %594 = vmatprep.subr.bf16.mxu0 0
        %595 = vmatpush1.bf16.msra.mxu0 0
        %596 = vmatprep.subr.bf16.mxu0 0
        %597 = vmatpush1.bf16.msra.mxu0 0
        %598 = vmatprep.subr.bf16.mxu0 0
        %599 = vmatpush1.bf16.msra.mxu0 0
        %600 = vmatprep.subr.bf16.mxu0 0
        %601 = vmatpush1.bf16.msra.mxu0 0
        %602 = vmatprep.subr.bf16.mxu0 0
        %603 = vmatpush1.bf16.msra.mxu0 0
        %604 = vmatprep.subr.bf16.mxu0 0
        %605 = vmatpush1.bf16.msra.mxu0 0
        %606 = vmatprep.subr.bf16.mxu0 0
        %607 = vmatpush1.bf16.msra.mxu0 0
        %608 = vmatprep.subr.bf16.mxu0 0
        %609 = vmatpush1.bf16.msra.mxu0 0
        %610 = vmatprep.mubr.bf16.mxu0 0
        %611 = vmatmul.mubr.bf16.gmra.mrb[0].mxu0 %v576
        %v612 = vpop.f32.mrb[0].mxu0
        %v613 = vadd.f32 0.0, %v612
        %v614 = vpop.f32.mrb[0].mxu0
        %v615 = vpop.f32.mrb[0].mxu0
        %v616 = vadd.f32 0.0, %v615
        %v617 = vpop.f32.mrb[0].mxu0
        %618 = vdwg.mxu0
        %s619 = sld [smem:[#allocation2 + %s25]]
        %v620 = vstv %s619
        %v621 = vmul.f32 %v620, %v365
        %v622 = vmul.f32 %v620, %v366
        %s623 = sld [smem:[#allocation4 + %s25]]
        %v624 = vstv %s623
        %v625 = vmul.f32 %v624, %v613
        %v626 = vmul.f32 %v624, %v616
        %v627 = vadd.f32 %v621, %v625
        %v628 = vadd.f32 %v622, %v626
        %s629 = sld [smem:[#allocation6 + %s25]]
        %v630 = vld [vmem:[%s351] sm:$0xff]
        %v631 = vld [vmem:[%s351 + $0x8] sm:$0xff]
        %v632 = vstv %s629
        %v633 = vmul.f32 %v632, %v630
        %v634 = vmul.f32 %v632, %v631
        %v635 = vadd.f32 %v627, %v633
        %v636 = vadd.f32 %v628, %v634
        %637 = vst [vmem:[%s355] sm:$0xff] %v635
        %638 = vst [vmem:[%s355 + $0x8] sm:$0xff] %v636
        %p639 = scmp.lt.s32.totalorder %s24, 0
        %s640 = scalar_select %p639, %s24, 0
        %s641 = smul.addr %s640, 8
        %s642 = scalar_lea.vmem %s7, %s641
        // Predicated region
        $region65: #{_sample_backward_sde.1} parent=47 // pred_check
          %p643 = pneg %p209
        $region66: #{_sample_backward_sde.1} parent=47 // pred_check_branch
          %645 = sbr.rel (%p643) target = $region68
        $region67: #{_sample_backward_sde.1} parent=47 // pred_region
          _
        $region68: #{_sample_backward_sde.1} parent=47 // pred_fallthru
          _
        // Predicated region
        $region69: #{_sample_backward_sde.1} parent=47 // pred_check
          %p646 = pneg %p209
        $region70: #{_sample_backward_sde.1} parent=47 // pred_check_branch
          %648 = sbr.rel (%p646) target = $region72
        $region71: #{_sample_backward_sde.1} parent=47 // pred_region
          %p649 = scmp.lt.s32.totalorder %s24, 0
          %s650 = scalar_select %p649, %s24, 0
          %s651 = smul.addr %s650, 8
          %s652 = scalar_lea.vmem %s7, %s651
        $region72: #{_sample_backward_sde.1} parent=47 // pred_fallthru
          _
      $region48: #{_sample_backward_sde.1} parent=5 // pred_fallthru
        _
      %p653 = scmp.le.s32.totalorder 2, %s15
      // Predicated region
      $region73: #{_sample_backward_sde.1} parent=5 // pred_check
        %p654 = pneg %p653
      $region74: #{_sample_backward_sde.1} parent=5 // pred_check_branch
        %656 = sbr.rel (%p654) target = $region76
      $region75: #{_sample_backward_sde.1} parent=5 // pred_region
        %s657 = ssub.s32 %s15, 2
      $region76: #{_sample_backward_sde.1} parent=5 // pred_fallthru
        _
    $region6: #{_sample_backward_sde.1} parent=1 // loop_footer
      %s19 = sadd.s32 1, %s15
    $region7: #{_sample_backward_sde.1} parent=1 // loop_footer_branch
      %14 = sbr.rel target = $region3
    $region8: #{_sample_backward_sde.1} parent=1 // loop_exit
      _
    %658 = vsyncpa [#allocation3], 1
    %s659 = scalar_lea.sflag [#allocation3], 1
    %660 = vsyncpa %s659, 1
    %661 = vsyncpa [#allocation5], 1

</llo_original>
